<compile_context>
chip_gen: v6e
topology: v6e:2x2x1
jax: 0.10.0
libtpu: 0.0.40
codegen_flags: <defaults>
</compile_context>

<pallas_src>
import jax
import jax.numpy as jnp
from jax.experimental import pallas as pl
from jax.experimental.pallas import tpu as pltpu

# Deterministic "config": mirrors output_block_args['single']['branch_index'].
OUTPUT_BLOCK_ARGS = {"single": {"branch_index": 1}}


# ---------------------------------------------------------------------------
# 1) Zero-cost Pallas pass-through: output aliases input, kernel moves nothing.
# ---------------------------------------------------------------------------

def _passthrough_kernel(x_ref, o_ref, flag_ref):
    # The output buffer IS the input buffer (input_output_aliases={0: 0}), so
    # there is nothing to compute and nothing to DMA.  A single SMEM scalar
    # store keeps the lowered kernel body non-trivial; it touches no HBM and
    # performs no vector work.
    del x_ref, o_ref
    flag_ref[0] = jnp.int32(1)


def _passthrough_pallas(x: jax.Array) -> jax.Array:
    return pl.pallas_call(
        _passthrough_kernel,
        out_shape=jax.ShapeDtypeStruct(x.shape, x.dtype),
        in_specs=[pl.BlockSpec(memory_space=pl.ANY)],   # leave in HBM, no auto-DMA
        out_specs=pl.BlockSpec(memory_space=pl.ANY),
        scratch_shapes=[pltpu.SMEM((1,), jnp.int32)],
        input_output_aliases={0: 0},                    # output reuses input buffer
    )(x)


# ---------------------------------------------------------------------------
# 2) Optional materializing copy (fresh output buffer):
#    - lane-dense [rows, 512] slab (last dim is a large multiple of 128 =>
#      unmasked vst, the biggest single lever for mem-bound kernels)
#    - dtype-aware sublane tiling (8 rows f32 / 16 bf16 / 32 int8)
#    - ~2 MiB blocks; 3-deep input buffering; total VMEM footprint ~10 MiB,
#      under the 16 MiB scoped default on v5e and far under v6e/v7x defaults
#    - "parallel" grid axis so v7x's two TensorCores split the stream
#    - small inputs take a single-block path (no grid loop, no per-step
#      ~0.35 us overhead).
# ---------------------------------------------------------------------------

_LANE_COLS = 512                      # last dim: multiple of 128 -> unmasked stores
_TARGET_TILE_BYTES = 2 * 1024 * 1024  # per-block budget (see VMEM note above)
_VMEM_LIMIT_BYTES = 64 * 1024 * 1024  # generous headroom for multi-buffering


def _copy_kernel(x_ref, o_ref):
    o_ref[...] = x_ref[...]


def _materialize_copy(x: jax.Array) -> jax.Array:
    orig_shape = x.shape
    dtype = x.dtype
    total = x.size
    itemsize = jnp.dtype(dtype).itemsize
    # Minimum sublane multiple for packed dtypes: 8 (32-bit), 16 (bf16), 32 (int8).
    sub_mult = max(8, 32 // itemsize)

    rows = -(-total // _LANE_COLS)
    row_bytes = _LANE_COLS * itemsize
    target_rows = max(sub_mult, _TARGET_TILE_BYTES // row_bytes)
    target_rows -= target_rows % sub_mult
    rows_min = -(-rows // sub_mult) * sub_mult
    tile_rows = min(target_rows, rows_min)
    rows_padded = -(-rows // tile_rows) * tile_rows
    num_blocks = rows_padded // tile_rows

    flat = x.reshape(-1)
    pad = rows_padded * _LANE_COLS - total
    if pad:
        flat = jnp.pad(flat, (0, pad))
    x2d = flat.reshape(rows_padded, _LANE_COLS)

    if num_blocks == 1:
        # Small input: single VMEM-resident block, no grid loop.
        y2d = pl.pallas_call(
            _copy_kernel,
            out_shape=jax.ShapeDtypeStruct((rows_padded, _LANE_COLS), dtype),
            in_specs=[pl.BlockSpec((rows_padded, _LANE_COLS), lambda: (0, 0))],
            out_specs=pl.BlockSpec((rows_padded, _LANE_COLS), lambda: (0, 0)),
            compiler_params=pltpu.CompilerParams(
                vmem_limit_bytes=_VMEM_LIMIT_BYTES),
        )(x2d)
    else:
        y2d = pl.pallas_call(
            _copy_kernel,
            out_shape=jax.ShapeDtypeStruct((rows_padded, _LANE_COLS), dtype),
            grid=(num_blocks,),
            in_specs=[pl.BlockSpec((tile_rows, _LANE_COLS), lambda i: (i, 0),
                                   pipeline_mode=pl.Buffered(3))],
            out_specs=pl.BlockSpec((tile_rows, _LANE_COLS), lambda i: (i, 0)),
            compiler_params=pltpu.CompilerParams(
                dimension_semantics=("parallel",),
                vmem_limit_bytes=_VMEM_LIMIT_BYTES),
        )(x2d)
    return y2d.reshape(-1)[:total].reshape(orig_shape)


# ---------------------------------------------------------------------------
# Module wrapper.
# ---------------------------------------------------------------------------

class SingleBranch:
    """JAX/Pallas port of the SingleBranch output block."""

    def __init__(self, *args, **kwargs):
        del args, kwargs  # mirrors the PyTorch module's unused ctor args
        self.params = OUTPUT_BLOCK_ARGS[self.get_name()]
        self.branch_index = self.params["branch_index"]

    def forward(self, branch_tensors: dict[int, jax.Array]) -> jax.Array:
        # Spec semantics: identity selection — zero bytes moved.
        return branch_tensors[self.branch_index]

    def forward_pallas(self, branch_tensors: dict[int, jax.Array]) -> jax.Array:
        # Same semantics, but through a Pallas no-op with aliased output
        # (no HBM read/write issued by the kernel itself).
        return _passthrough_pallas(branch_tensors[self.branch_index])

    def forward_copy(self, branch_tensors: dict[int, jax.Array]) -> jax.Array:
        # Same semantics, but guarantees a freshly materialized output buffer.
        return _materialize_copy(branch_tensors[self.branch_index])

    @staticmethod
    def get_name() -> str:
        return "single"


if __name__ == "__main__":
    key = jax.random.PRNGKey(0)
    k0, k1, k2 = jax.random.split(key, 3)
    # Small NCHW branch tensors: batch=2, channels=4, spatial=16.
    branch_tensors = {
        0: jax.random.normal(k0, (2, 4, 16, 16), dtype=jnp.float32),
        1: jax.random.normal(k1, (2, 4, 16, 16), dtype=jnp.float32),
        2: jax.random.normal(k2, (2, 4, 16, 16), dtype=jnp.float32),
    }

    block = SingleBranch()
    expected = branch_tensors[block.branch_index]

    # 1) Spec semantics: zero-cost identity selection.
    out = jax.block_until_ready(block.forward(branch_tensors))
    assert out.shape == expected.shape and out.dtype == expected.dtype
    assert bool(jnp.array_equal(out, expected))

    # 2) Pallas pass-through (aliased no-op kernel) — run the kernel once.
    out_pallas = jax.block_until_ready(block.forward_pallas(branch_tensors))
    assert out_pallas.shape == expected.shape and out_pallas.dtype == expected.dtype
    assert bool(jnp.array_equal(out_pallas, expected))

    # 3) Materializing copy path; also exercise a "hard" layout (7x7 spatial,
    #    bf16) and a multi-block streaming shape to check the lane-dense
    #    padding, dtype-aware tiling, and the pipelined grid path.
    out_copy = jax.block_until_ready(block.forward_copy(branch_tensors))
    assert bool(jnp.array_equal(out_copy, expected))

    hard = jax.random.normal(k0, (2, 4, 7, 7)).astype(jnp.bfloat16)
    hard_copy = jax.block_until_ready(_materialize_copy(hard))
    assert hard_copy.shape == hard.shape and hard_copy.dtype == hard.dtype
    assert bool(jnp.array_equal(hard_copy, hard))

    big = jax.random.normal(k1, (8, 16, 128, 128), dtype=jnp.float32)  # 8 MiB
    big_copy = jax.block_until_ready(_materialize_copy(big))
    assert big_copy.shape == big.shape and big_copy.dtype == big.dtype
    assert bool(jnp.array_equal(big_copy, big))

    print("KERNEL_OK")
</pallas_src>

<mosaic_0001>
module attributes {stable_mosaic.version = 11 : i64} {
  func.func @_passthrough_kernel(%arg0: memref<2x4x16x16xf32, #tpu.memory_space<any>>, %arg1: memref<2x4x16x16xf32, #tpu.memory_space<any>>, %arg2: memref<1xi32, #tpu.memory_space<smem>>) attributes {dimension_semantics = [], scalar_prefetch = 0 : i64, scratch_operands = 1 : i64, tpu.core_type = #tpu.core_type<tc>} {
    %c1_i32 = arith.constant 1 : i32
    %c0 = arith.constant 0 : index
    %0 = memref.load %arg2[%c0] : memref<1xi32, #tpu.memory_space<smem>>
    memref.store %c1_i32, %arg2[%c0] : memref<1xi32, #tpu.memory_space<smem>>
    return
  }
}

</mosaic_0001>

<llo_original>
// kernel: tpu_custom_call.1
$region0: #{tpu_custom_call.1}
  #allocation0 [shape = 'u32[]', space=smem, size = 0x4, offset = 0x4, fixed_abs, tag = 'smem constant byte address 0x4 - core index']
  #allocation1 [shape = 'u32[144,128]{1,0:T(1,128)}', space=vmem, size = 0x12000, scoped, tag = 'internal scratch']
  #allocation2 [shape = 's32[1]{0:T(128)}', space=smem, size = 0x200, scoped, tag = 'scratch operand']
  %s0 = inlined_call_operand.hbm [shape: f32[2,4,16,16], index: 0, kind: input, shape index: {}, may-alias: {0,1}]
  %s1 = inlined_call_operand.hbm [shape: f32[2,4,16,16], index: 1, kind: output, shape index: {}, may-alias: {0,1}]
  %s2 = sld [smem:[#allocation0]]
  $region2: #{tpu_custom_call.1} parent=0
    _
  %s4 = ssub.s32 1, %s2
  %s5 = scalar_select 0, %s4, %s2
  %s6 = scalar_lea.smem [#allocation2], 0
  %7 = sst [smem:[%s6]] 1

</llo_original>
